<compile_context>
chip_gen: v6e
topology: v6e:2x2x1
jax: 0.10.0
libtpu: 0.0.40
codegen_flags: <defaults>
</compile_context>

<pallas_src>
import functools

import jax
import jax.numpy as jnp
from jax import lax
from jax.experimental import pallas as pl
from jax.experimental.pallas import tpu as pltpu

_EPS = 1e-8                    # torch.nn.CosineSimilarity default eps
_TEMP = 0.07                   # temperature used in the module
_INV_TEMP = 1.0 / _TEMP
_DIAG_FILL = -10.0 * _INV_TEMP  # -10 filled BEFORE the /0.07 in the original
_NEG_BIG = -1e30               # mask value for padded key columns


def _round_up(x, m):
    return ((x + m - 1) // m) * m


def _make_kernel(b_actual, tm, tn, num_j):
    """Builds the tiled online-logsumexp kernel (b_actual/tm/tn are static)."""
    has_pad = (b_actual % tn) != 0

    def kernel(q_ref, kpos_ref, kneg_ref, loss_ref, pos_sc, m_sc, s_sc):
        i = pl.program_id(0)          # query row-tile index
        j = pl.program_id(1)          # key column-tile index (reduction axis)

        # ---- normalize q rows in f32, fold 1/temperature into q_hat --------
        q32 = q_ref[...].astype(jnp.float32)                       # (tm, D)
        q_inv = lax.rsqrt(
            jnp.maximum(jnp.sum(q32 * q32, axis=-1, keepdims=True),
                        _EPS * _EPS))
        q_unit = q32 * q_inv                                        # unit rows
        q_hat = (q_unit * _INV_TEMP).astype(q_ref.dtype)            # MXU operand

        # ---- first column step: positive logit + init online-LSE state -----
        @pl.when(j == 0)
        def _():
            kp32 = kpos_ref[...].astype(jnp.float32)                # (tm, D)
            kp_inv = lax.rsqrt(
                jnp.maximum(jnp.sum(kp32 * kp32, axis=-1, keepdims=True),
                            _EPS * _EPS))
            pos = jnp.sum(q_unit * (kp32 * kp_inv), axis=-1,
                          keepdims=True) * _INV_TEMP                # (tm, 1)
            pos_sc[...] = pos
            m_sc[...] = pos                     # running max starts at l_pos
            s_sc[...] = jnp.ones_like(pos)      # exp(pos - pos) = 1

        # ---- negative logits for this (row, col) tile on the MXU -----------
        kn32 = kneg_ref[...].astype(jnp.float32)                    # (tn, D)
        kn_inv = lax.rsqrt(
            jnp.maximum(jnp.sum(kn32 * kn32, axis=-1, keepdims=True),
                        _EPS * _EPS))
        kn_hat = (kn32 * kn_inv).astype(kneg_ref.dtype)
        logits = jnp.dot(q_hat, kn_hat.T,
                         preferred_element_type=jnp.float32)        # (tm, tn)

        row_g = lax.broadcasted_iota(jnp.int32, (tm, tn), 0) + i * tm
        col_g = lax.broadcasted_iota(jnp.int32, (tm, tn), 1) + j * tn
        logits = jnp.where(row_g == col_g, _DIAG_FILL, logits)
        if has_pad:  # static: only emitted when B was padded up to the tile
            logits = jnp.where(col_g >= b_actual, _NEG_BIG, logits)

        # ---- online logsumexp update ----------------------------------------
        m_prev = m_sc[...]
        m_new = jnp.maximum(m_prev, jnp.max(logits, axis=-1, keepdims=True))
        s_sc[...] = (s_sc[...] * jnp.exp(m_prev - m_new)
                     + jnp.sum(jnp.exp(logits - m_new), axis=-1, keepdims=True))
        m_sc[...] = m_new

        # ---- finalize on the last column tile for this row tile ------------
        @pl.when(j == num_j - 1)
        def _():
            loss_ref[...] = m_sc[...] + jnp.log(s_sc[...]) - pos_sc[...]

    return kernel


def patch_nce_loss(feat_q, feat_k, *, block=128):
    """Pallas implementation of PatchNCELoss.forward. Returns loss of shape (B,)."""
    B, D = feat_q.shape
    assert feat_k.shape == (B, D)

    tm = min(block, _round_up(B, 8))   # (8,128) sublane rule; full D on lanes
    tn = tm
    b_pad = _round_up(B, tm)
    num_i = b_pad // tm
    num_j = b_pad // tn

    q_in, k_in = feat_q, feat_k
    if b_pad != B:
        pad = ((0, b_pad - B), (0, 0))
        q_in = jnp.pad(feat_q, pad)
        k_in = jnp.pad(feat_k, pad)

    kernel = _make_kernel(B, tm, tn, num_j)

    itemsize = jnp.dtype(feat_q.dtype).itemsize
    cost = pl.CostEstimate(
        flops=2 * B * B * D + 6 * B * D,
        transcendentals=B * B + 2 * B,
        bytes_accessed=2 * B * D * itemsize + B * 4,
    )

    grid_spec = pltpu.PrefetchScalarGridSpec(
        num_scalar_prefetch=0,
        grid=(num_i, num_j),
        in_specs=[
            # q row tile: resident across the whole j (reduction) sweep.
            pl.BlockSpec((tm, D), lambda i, j: (i, 0)),
            # positive-key tile (same rows as q): also resident across j.
            pl.BlockSpec((tm, D), lambda i, j: (i, 0)),
            # negative-key column tile: streams along j (double-buffered).
            pl.BlockSpec((tn, D), lambda i, j: (j, 0)),
        ],
        # Accumulator output: same block across j, written on the last j step.
        # (Kept (tm,1); lane-dense (1,tm) layout would need an in-kernel
        #  transpose for a few bytes of store traffic -- not worth the risk.)
        out_specs=pl.BlockSpec((tm, 1), lambda i, j: (i, 0)),
        scratch_shapes=[pltpu.VMEM((tm, 1), jnp.float32)] * 3,  # pos, m, s
    )

    out = pl.pallas_call(
        kernel,
        out_shape=jax.ShapeDtypeStruct((b_pad, 1), jnp.float32),
        grid_spec=grid_spec,
        compiler_params=pltpu.CompilerParams(
            dimension_semantics=("parallel", "arbitrary"),
            vmem_limit_bytes=32 * 1024 * 1024,
        ),
        cost_estimate=cost,
    )(q_in, k_in, k_in)

    return out[:B, 0]


def _patch_nce_loss_ref(feat_q, feat_k):
    """Pure-JAX reference mirroring the PyTorch module, for verification."""
    q = feat_q.astype(jnp.float32)
    k = feat_k.astype(jnp.float32)
    qn = jnp.sqrt(jnp.sum(q * q, axis=-1, keepdims=True))
    kn = jnp.sqrt(jnp.sum(k * k, axis=-1, keepdims=True))
    sim = (q @ k.T) / jnp.maximum(qn * kn.T, _EPS)
    B = sim.shape[0]
    l_pos = jnp.diagonal(sim)[:, None]
    l_neg = jnp.where(jnp.eye(B, dtype=bool), -10.0, sim)
    out = jnp.concatenate([l_pos, l_neg], axis=1) / _TEMP
    return jax.nn.logsumexp(out, axis=-1) - out[:, 0]


if __name__ == "__main__":
    key = jax.random.PRNGKey(0)
    # Small shapes: (batch*patches, feature_dim). Second case exercises the
    # padding / column-masking path (B not a multiple of the tile).
    for (B, D) in [(8, 32), (20, 48)]:
        key, kq, kk = jax.random.split(key, 3)
        feat_q = jax.random.normal(kq, (B, D), dtype=jnp.float32)
        feat_k = jax.random.normal(kk, (B, D), dtype=jnp.float32)

        loss = jax.block_until_ready(patch_nce_loss(feat_q, feat_k))
        ref = _patch_nce_loss_ref(feat_q, feat_k)

        assert loss.shape == (B,), (loss.shape, B)
        assert jnp.allclose(loss, ref, atol=1e-4, rtol=1e-4), (B, D, loss, ref)

    print("KERNEL_OK")
</pallas_src>

<mosaic_0001>
module attributes {stable_mosaic.version = 11 : i64} {
  func.func @kernel(%arg0: i32, %arg1: i32, %arg2: memref<8x32xf32, #tpu.memory_space<vmem>>, %arg3: memref<8x32xf32, #tpu.memory_space<vmem>>, %arg4: memref<8x32xf32, #tpu.memory_space<vmem>>, %arg5: memref<8x1xf32, #tpu.memory_space<vmem>>, %arg6: memref<8x1xf32, #tpu.memory_space<vmem>>, %arg7: memref<8x1xf32, #tpu.memory_space<vmem>>, %arg8: memref<8x1xf32, #tpu.memory_space<vmem>>) attributes {dimension_semantics = [#tpu.dimension_semantics<parallel>, #tpu.dimension_semantics<arbitrary>], iteration_bounds = array<i64: 1, 1>, scalar_prefetch = 0 : i64, scratch_operands = 3 : i64, tpu.core_type = #tpu.core_type<tc>, window_params = [{transform_indices = @transform_0, window_bounds = array<i64: 8, 32>}, {transform_indices = @transform_1, window_bounds = array<i64: 8, 32>}, {transform_indices = @transform_2, window_bounds = array<i64: 8, 32>}, {transform_indices = @transform_3, window_bounds = array<i64: 8, 1>}]} {
    %c0 = arith.constant 0 : index
    %c0_0 = arith.constant 0 : index
    %0 = vector.load %arg2[%c0, %c0_0] : memref<8x32xf32, #tpu.memory_space<vmem>>, vector<8x32xf32>
    %1 = arith.mulf %0, %0 : vector<8x32xf32>
    %cst = arith.constant dense<0.000000e+00> : vector<8xf32>
    %2 = vector.multi_reduction <add>, %1, %cst [1] : vector<8x32xf32> to vector<8xf32>
    %3 = vector.shape_cast %2 : vector<8xf32> to vector<8x1xf32>
    %cst_1 = arith.constant 1.000000e-16 : f32
    %4 = vector.broadcast %cst_1 : f32 to vector<8x1xf32>
    %5 = arith.maximumf %3, %4 : vector<8x1xf32>
    %6 = math.rsqrt %5 : vector<8x1xf32>
    %7 = vector.broadcast %6 : vector<8x1xf32> to vector<8x32xf32>
    %8 = arith.mulf %0, %7 : vector<8x32xf32>
    %cst_2 = arith.constant 14.2857141 : f32
    %9 = vector.broadcast %cst_2 : f32 to vector<8x32xf32>
    %10 = arith.mulf %8, %9 : vector<8x32xf32>
    %c0_i32 = arith.constant 0 : i32
    %11 = arith.cmpi eq, %arg1, %c0_i32 : i32
    %12 = arith.extui %11 : i1 to i32
    %c0_i32_3 = arith.constant 0 : i32
    %13 = arith.cmpi ne, %12, %c0_i32_3 : i32
    scf.if %13 {
      %c0_23 = arith.constant 0 : index
      %c0_24 = arith.constant 0 : index
      %55 = vector.load %arg3[%c0_23, %c0_24] : memref<8x32xf32, #tpu.memory_space<vmem>>, vector<8x32xf32>
      %56 = arith.mulf %55, %55 : vector<8x32xf32>
      %cst_25 = arith.constant dense<0.000000e+00> : vector<8xf32>
      %57 = vector.multi_reduction <add>, %56, %cst_25 [1] : vector<8x32xf32> to vector<8xf32>
      %58 = vector.shape_cast %57 : vector<8xf32> to vector<8x1xf32>
      %cst_26 = arith.constant 1.000000e-16 : f32
      %59 = vector.broadcast %cst_26 : f32 to vector<8x1xf32>
      %60 = arith.maximumf %58, %59 : vector<8x1xf32>
      %61 = math.rsqrt %60 : vector<8x1xf32>
      %62 = vector.broadcast %61 : vector<8x1xf32> to vector<8x32xf32>
      %63 = arith.mulf %55, %62 : vector<8x32xf32>
      %64 = arith.mulf %8, %63 : vector<8x32xf32>
      %cst_27 = arith.constant dense<0.000000e+00> : vector<8xf32>
      %65 = vector.multi_reduction <add>, %64, %cst_27 [1] : vector<8x32xf32> to vector<8xf32>
      %66 = vector.shape_cast %65 : vector<8xf32> to vector<8x1xf32>
      %cst_28 = arith.constant 14.2857141 : f32
      %67 = vector.broadcast %cst_28 : f32 to vector<8x1xf32>
      %68 = arith.mulf %66, %67 : vector<8x1xf32>
      %c0_29 = arith.constant 0 : index
      %c0_30 = arith.constant 0 : index
      %69 = vector.load %arg6[%c0_29, %c0_30] : memref<8x1xf32, #tpu.memory_space<vmem>>, vector<8x1xf32>
      tpu.vector_store %arg6[%c0_29, %c0_30], %68 {strides = array<i32>} : memref<8x1xf32, #tpu.memory_space<vmem>>, vector<8x1xf32>,
      %c0_31 = arith.constant 0 : index
      %c0_32 = arith.constant 0 : index
      %70 = vector.load %arg7[%c0_31, %c0_32] : memref<8x1xf32, #tpu.memory_space<vmem>>, vector<8x1xf32>
      tpu.vector_store %arg7[%c0_31, %c0_32], %68 {strides = array<i32>} : memref<8x1xf32, #tpu.memory_space<vmem>>, vector<8x1xf32>,
      %cst_33 = arith.constant 1.000000e+00 : f32
      %71 = vector.broadcast %cst_33 : f32 to vector<8x1xf32>
      %c0_34 = arith.constant 0 : index
      %c0_35 = arith.constant 0 : index
      %72 = vector.load %arg8[%c0_34, %c0_35] : memref<8x1xf32, #tpu.memory_space<vmem>>, vector<8x1xf32>
      tpu.vector_store %arg8[%c0_34, %c0_35], %71 {strides = array<i32>} : memref<8x1xf32, #tpu.memory_space<vmem>>, vector<8x1xf32>,
    } else {
    }
    %c0_4 = arith.constant 0 : index
    %c0_5 = arith.constant 0 : index
    %14 = vector.load %arg4[%c0_4, %c0_5] : memref<8x32xf32, #tpu.memory_space<vmem>>, vector<8x32xf32>
    %15 = arith.mulf %14, %14 : vector<8x32xf32>
    %cst_6 = arith.constant dense<0.000000e+00> : vector<8xf32>
    %16 = vector.multi_reduction <add>, %15, %cst_6 [1] : vector<8x32xf32> to vector<8xf32>
    %17 = vector.shape_cast %16 : vector<8xf32> to vector<8x1xf32>
    %cst_7 = arith.constant 1.000000e-16 : f32
    %18 = vector.broadcast %cst_7 : f32 to vector<8x1xf32>
    %19 = arith.maximumf %17, %18 : vector<8x1xf32>
    %20 = math.rsqrt %19 : vector<8x1xf32>
    %21 = vector.broadcast %20 : vector<8x1xf32> to vector<8x32xf32>
    %22 = arith.mulf %14, %21 : vector<8x32xf32>
    %23 = tpu.transpose %22, [1, 0] : vector<8x32xf32> -> vector<32x8xf32>
    %cst_8 = arith.constant dense<0.000000e+00> : vector<8x8xf32>
    %24 = tpu.matmul %10, %23, %cst_8 {dimension_numbers = #tpu.dot_dimension_numbers<[1], [0], [0], [1], [0, 0, 1, 1], [], []>} : vector<8x32xf32>, vector<32x8xf32>, vector<8x8xf32> -> vector<8x8xf32>
    %25 = tpu.iota {dimensions = array<i32: 0>} : vector<8x8xi32>
    %c8_i32 = arith.constant 8 : i32
    %26 = arith.muli %arg0, %c8_i32 : i32
    %27 = vector.broadcast %26 : i32 to vector<8x8xi32>
    %28 = arith.addi %25, %27 : vector<8x8xi32>
    %29 = tpu.iota {dimensions = array<i32: 1>} : vector<8x8xi32>
    %c8_i32_9 = arith.constant 8 : i32
    %30 = arith.muli %arg1, %c8_i32_9 : i32
    %31 = vector.broadcast %30 : i32 to vector<8x8xi32>
    %32 = arith.addi %29, %31 : vector<8x8xi32>
    %33 = arith.cmpi eq, %28, %32 : vector<8x8xi32>
    %cst_10 = arith.constant -142.857147 : f32
    %34 = vector.broadcast %cst_10 : f32 to vector<8x8xf32>
    %35 = arith.select %33, %34, %24 : vector<8x8xi1>, vector<8x8xf32>
    %c0_11 = arith.constant 0 : index
    %c0_12 = arith.constant 0 : index
    %36 = vector.load %arg7[%c0_11, %c0_12] : memref<8x1xf32, #tpu.memory_space<vmem>>, vector<8x1xf32>
    %cst_13 = arith.constant dense<0xFF800000> : vector<8xf32>
    %37 = vector.multi_reduction <maximumf>, %35, %cst_13 [1] : vector<8x8xf32> to vector<8xf32>
    %38 = vector.shape_cast %37 : vector<8xf32> to vector<8x1xf32>
    %39 = arith.maximumf %36, %38 : vector<8x1xf32>
    %c0_14 = arith.constant 0 : index
    %c0_15 = arith.constant 0 : index
    %40 = vector.load %arg8[%c0_14, %c0_15] : memref<8x1xf32, #tpu.memory_space<vmem>>, vector<8x1xf32>
    %41 = arith.subf %36, %39 : vector<8x1xf32>
    %42 = math.exp %41 : vector<8x1xf32>
    %43 = arith.mulf %40, %42 : vector<8x1xf32>
    %44 = vector.broadcast %39 : vector<8x1xf32> to vector<8x8xf32>
    %45 = arith.subf %35, %44 : vector<8x8xf32>
    %46 = math.exp %45 : vector<8x8xf32>
    %cst_16 = arith.constant dense<0.000000e+00> : vector<8xf32>
    %47 = vector.multi_reduction <add>, %46, %cst_16 [1] : vector<8x8xf32> to vector<8xf32>
    %48 = vector.shape_cast %47 : vector<8xf32> to vector<8x1xf32>
    %49 = arith.addf %43, %48 : vector<8x1xf32>
    %c0_17 = arith.constant 0 : index
    %c0_18 = arith.constant 0 : index
    %50 = vector.load %arg8[%c0_17, %c0_18] : memref<8x1xf32, #tpu.memory_space<vmem>>, vector<8x1xf32>
    tpu.vector_store %arg8[%c0_17, %c0_18], %49 {strides = array<i32>} : memref<8x1xf32, #tpu.memory_space<vmem>>, vector<8x1xf32>,
    %c0_19 = arith.constant 0 : index
    %c0_20 = arith.constant 0 : index
    %51 = vector.load %arg7[%c0_19, %c0_20] : memref<8x1xf32, #tpu.memory_space<vmem>>, vector<8x1xf32>
    tpu.vector_store %arg7[%c0_19, %c0_20], %39 {strides = array<i32>} : memref<8x1xf32, #tpu.memory_space<vmem>>, vector<8x1xf32>,
    %c0_i32_21 = arith.constant 0 : i32
    %52 = arith.cmpi eq, %arg1, %c0_i32_21 : i32
    %53 = arith.extui %52 : i1 to i32
    %c0_i32_22 = arith.constant 0 : i32
    %54 = arith.cmpi ne, %53, %c0_i32_22 : i32
    scf.if %54 {
      %c0_23 = arith.constant 0 : index
      %c0_24 = arith.constant 0 : index
      %55 = vector.load %arg7[%c0_23, %c0_24] : memref<8x1xf32, #tpu.memory_space<vmem>>, vector<8x1xf32>
      %c0_25 = arith.constant 0 : index
      %c0_26 = arith.constant 0 : index
      %56 = vector.load %arg8[%c0_25, %c0_26] : memref<8x1xf32, #tpu.memory_space<vmem>>, vector<8x1xf32>
      %57 = math.log %56 : vector<8x1xf32>
      %58 = arith.addf %55, %57 : vector<8x1xf32>
      %c0_27 = arith.constant 0 : index
      %c0_28 = arith.constant 0 : index
      %59 = vector.load %arg6[%c0_27, %c0_28] : memref<8x1xf32, #tpu.memory_space<vmem>>, vector<8x1xf32>
      %60 = arith.subf %58, %59 : vector<8x1xf32>
      %c0_29 = arith.constant 0 : index
      %c0_30 = arith.constant 0 : index
      %61 = vector.load %arg5[%c0_29, %c0_30] : memref<8x1xf32, #tpu.memory_space<vmem>>, vector<8x1xf32>
      tpu.vector_store %arg5[%c0_29, %c0_30], %60 {strides = array<i32>} : memref<8x1xf32, #tpu.memory_space<vmem>>, vector<8x1xf32>,
    } else {
    }
    return
  }
  func.func @transform_0(%arg0: i32, %arg1: i32) -> (i32, i32) {
    %c0_i32 = arith.constant 0 : i32
    %c0_i32_0 = arith.constant 0 : i32
    return %arg0, %c0_i32 : i32, i32
  }
  func.func @transform_1(%arg0: i32, %arg1: i32) -> (i32, i32) {
    %c0_i32 = arith.constant 0 : i32
    %c0_i32_0 = arith.constant 0 : i32
    return %arg0, %c0_i32 : i32, i32
  }
  func.func @transform_2(%arg0: i32, %arg1: i32) -> (i32, i32) {
    %c0_i32 = arith.constant 0 : i32
    %c0_i32_0 = arith.constant 0 : i32
    return %arg1, %c0_i32 : i32, i32
  }
  func.func @transform_3(%arg0: i32, %arg1: i32) -> (i32, i32) {
    %c0_i32 = arith.constant 0 : i32
    %c0_i32_0 = arith.constant 0 : i32
    return %arg0, %c0_i32 : i32, i32
  }
}

</mosaic_0001>

<llo_original>
// kernel: tpu_custom_call.1
$region0: #{tpu_custom_call.1}
  #allocation0 [shape = 'u32[]', space=smem, size = 0x4, offset = 0x4, fixed_abs, tag = 'smem constant byte address 0x4 - core index']
  #allocation1 [shape = 'u32[144,128]{1,0:T(1,128)}', space=vmem, size = 0x12000, scoped, tag = 'internal scratch']
  #allocation2 [shape = 'f32[8,1]{1,0:T(8,128)}', space=vmem, size = 0x1000, scoped, tag = 'scratch operand']
  #allocation3 [shape = 'f32[8,1]{1,0:T(8,128)}', space=vmem, size = 0x1000, scoped, tag = 'scratch operand']
  #allocation4 [shape = 'f32[8,1]{1,0:T(8,128)}', space=vmem, size = 0x1000, scoped, tag = 'scratch operand']
  %s0 = inlined_call_operand.hbm [shape: f32[8,32], index: 0, kind: input, shape index: {}]
  %s1 = inlined_call_operand.hbm [shape: f32[8,32], index: 1, kind: input, shape index: {}]
  %s2 = inlined_call_operand.hbm [shape: f32[8,32], index: 2, kind: input, shape index: {}]
  %s3 = inlined_call_operand.vmem [shape: f32[8,1], index: 3, kind: output, shape index: {}]
  %s4 = sld [smem:[#allocation0]]
  $region42: #{tpu_custom_call.1} parent=0
    _
  %s6 = ssub.s32 1, %s4
  %s7 = scalar_select 0, %s6, %s4
  $region1: #{tpu_custom_call.1} parent=0
    #allocation5 [shape = 'u8[4096]{0}', space=vmem, size = 0x1000, scoped, tag = 'input window, operand 0, single buffered']
    #allocation6 [shape = 's32[1]{0}', space=sflag, size = 0x4, scoped, tag = 'scoped memory for tpu_custom_call.1']
    #allocation7 [shape = 'u8[4096]{0}', space=vmem, size = 0x1000, scoped, tag = 'input window, operand 1, single buffered']
    #allocation8 [shape = 's32[1]{0}', space=sflag, size = 0x4, scoped, tag = 'scoped memory for tpu_custom_call.1']
    #allocation9 [shape = 'u8[4096]{0}', space=vmem, size = 0x1000, scoped, tag = 'input window, operand 2, single buffered']
    %8 = vsyncpa [#allocation6], 0
    %9 = vsyncpa [#allocation8], 0
    // Predicated region
    $region2: #{tpu_custom_call.1} parent=1 // pred_check
      _
    $region3: #{tpu_custom_call.1} parent=1 // pred_check_branch
      %11 = sbr.rel (0) target = $region5
    $region4: #{tpu_custom_call.1} parent=1 // pred_region
      %s13 = ssub.s32 128, 128
      %14 = vsyncadd [#allocation6], %s13
      %s16 = sshll.u32 [#allocation5], 4
      %s17 = int_to_ptr.vmem [resolvable:$true] %s16
      %19 = dma.hbm_to_vmem [thread:$0]  %s0, 128, %s17, [#allocation6]
    $region5: #{tpu_custom_call.1} parent=1 // pred_fallthru
      _
    // Predicated region
    $region6: #{tpu_custom_call.1} parent=1 // pred_check
      _
    $region7: #{tpu_custom_call.1} parent=1 // pred_check_branch
      %21 = sbr.rel (0) target = $region9
    $region8: #{tpu_custom_call.1} parent=1 // pred_region
      %s23 = ssub.s32 128, 128
      %24 = vsyncadd [#allocation8], %s23
      %s26 = sshll.u32 [#allocation7], 4
      %s27 = int_to_ptr.vmem [resolvable:$true] %s26
      %29 = dma.hbm_to_vmem [thread:$0]  %s1, 128, %s27, [#allocation8]
    $region9: #{tpu_custom_call.1} parent=1 // pred_fallthru
      _
    // Predicated region
    $region10: #{tpu_custom_call.1} parent=1 // pred_check
      _
    $region11: #{tpu_custom_call.1} parent=1 // pred_check_branch
      %31 = sbr.rel (0) target = $region13
    $region12: #{tpu_custom_call.1} parent=1 // pred_region
      %s33 = ssub.s32 128, 128
      %34 = vsyncadd [#allocation8], %s33
      %s36 = sshll.u32 [#allocation9], 4
      %s37 = int_to_ptr.vmem [resolvable:$true] %s36
      %39 = dma.hbm_to_vmem [thread:$0]  %s2, 128, %s37, [#allocation8]
    $region13: #{tpu_custom_call.1} parent=1 // pred_fallthru
      _
    // Predicated region
    $region14: #{tpu_custom_call.1} parent=1 // pred_check
      _
    $region15: #{tpu_custom_call.1} parent=1 // pred_check_branch
      %41 = sbr.rel (0) target = $region17
    $region16: #{tpu_custom_call.1} parent=1 // pred_region
      %42 = dma.done [#allocation6], 128
    $region17: #{tpu_custom_call.1} parent=1 // pred_fallthru
      _
    // Predicated region
    $region18: #{tpu_custom_call.1} parent=1 // pred_check
      _
    $region19: #{tpu_custom_call.1} parent=1 // pred_check_branch
      %44 = sbr.rel (0) target = $region21
    $region20: #{tpu_custom_call.1} parent=1 // pred_region
      %45 = dma.done [#allocation8], 128
    $region21: #{tpu_custom_call.1} parent=1 // pred_fallthru
      _
    // Predicated region
    $region22: #{tpu_custom_call.1} parent=1 // pred_check
      _
    $region23: #{tpu_custom_call.1} parent=1 // pred_check_branch
      %47 = sbr.rel (0) target = $region25
    $region24: #{tpu_custom_call.1} parent=1 // pred_region
      %48 = dma.done [#allocation8], 128
    $region25: #{tpu_custom_call.1} parent=1 // pred_fallthru
      _
    %v49 = vld [vmem:[#allocation5] sm:$0xff]
    %v50 = vmul.f32 %v49, %v49
    %vm51 = vcmask 261120
    %v52 = vsel %vm51, %v50, 0.0
    %53 = vadd.xlane.f32.xlu0 %v52
    %v54 = vpop.xlane.xlu0 %53
    %v55 = vmax.f32 %v54, 1e-16
    %v56 = vrsqrt.pop %v55
    %v57 = vmul.f32 %v49, %v56
    %v58 = vmul.f32 %v57, 14.285714
    %p59 = scmp.eq.s32.totalorder 0, 0
    // Predicated region
    $region26: #{tpu_custom_call.1} parent=1 // pred_check
      %p60 = pneg %p59
    $region27: #{tpu_custom_call.1} parent=1 // pred_check_branch
      %62 = sbr.rel (%p60) target = $region29
    $region28: #{tpu_custom_call.1} parent=1 // pred_region
      %v63 = vld [vmem:[#allocation7] sm:$0xff]
      %v64 = vmul.f32 %v63, %v63
      %v65 = vsel %vm51, %v64, 0.0
      %66 = vadd.xlane.f32.xlu0 %v65
      %v67 = vpop.xlane.xlu0 %66
      %v68 = vmax.f32 %v67, 1e-16
      %v69 = vrsqrt.pop %v68
      %v70 = vmul.f32 %v63, %v69
      %v71 = vmul.f32 %v57, %v70
      %v72 = vsel %vm51, %v71, 0.0
      %73 = vadd.xlane.f32.xlu0 %v72
      %v74 = vpop.xlane.xlu0 %73
      %v75 = vmul.f32 %v74, 14.285714
      %vm76 = vcmask 7168
      %77 = vst.msk [vmem:[#allocation2] sm:$0xff] %vm76, %v75
      %78 = vst.msk [vmem:[#allocation3] sm:$0xff] %vm76, %v75
      %79 = vst.msk [vmem:[#allocation4] sm:$0xff] %vm76, 1.0
    $region29: #{tpu_custom_call.1} parent=1 // pred_fallthru
      _
    %v80 = vld [vmem:[#allocation9] sm:$0xff]
    %v81 = vmul.f32 %v80, %v80
    %v82 = vsel %vm51, %v81, 0.0
    %83 = vadd.xlane.f32.xlu0 %v82
    %v84 = vpop.xlane.xlu0 %83
    %v85 = vmax.f32 %v84, 1e-16
    %v86 = vrsqrt.pop %v85
    %v87 = vmul.f32 %v80, %v86
    %v89 = vsel %vm51, %v58, 0
    %v92 = vsel %vm51, %v87, 0
    %94 = vmatprep.subr.mxu0 0.0
    %95 = vmatpush1.xpose.msra.mxu0 0.0
    %96 = vmatprep.subr.mxu0 0.0
    %97 = vmatpush1.xpose.msra.mxu0 0.0
    %98 = vmatprep.subr.mxu0 0.0
    %99 = vmatpush1.xpose.msra.mxu0 0.0
    %100 = vmatprep.subr.mxu0 0.0
    %101 = vmatpush1.xpose.msra.mxu0 0.0
    %102 = vmatprep.subr.mxu0 0.0
    %103 = vmatpush1.xpose.msra.mxu0 0.0
    %104 = vmatprep.subr.mxu0 0.0
    %105 = vmatpush1.xpose.msra.mxu0 0.0
    %106 = vmatprep.subr.mxu0 0.0
    %107 = vmatpush1.xpose.msra.mxu0 0.0
    %108 = vmatprep.subr.mxu0 0.0
    %109 = vmatpush1.xpose.msra.mxu0 0.0
    %110 = vmatprep.subr.mxu0 0.0
    %111 = vmatpush1.xpose.msra.mxu0 0.0
    %112 = vmatprep.subr.mxu0 0.0
    %113 = vmatpush1.xpose.msra.mxu0 0.0
    %114 = vmatprep.subr.mxu0 0.0
    %115 = vmatpush1.xpose.msra.mxu0 0.0
    %116 = vmatprep.subr.mxu0 0.0
    %117 = vmatpush1.xpose.msra.mxu0 0.0
    %118 = vmatprep.subr.mxu0 0.0
    %119 = vmatpush1.xpose.msra.mxu0 0.0
    %120 = vmatprep.subr.mxu0 0.0
    %121 = vmatpush1.xpose.msra.mxu0 0.0
    %122 = vmatprep.subr.mxu0 0.0
    %123 = vmatpush1.xpose.msra.mxu0 0.0
    %124 = vmatprep.subr.mxu0 0.0
    %125 = vmatpush1.xpose.msra.mxu0 %v92
    %126 = vmatprep.subr.mxu0 0.0
    %127 = vmatpush2.xpose.msra.mxu0 0.0
    %128 = vmatprep.subr.mxu0 0.0
    %129 = vmatpush2.xpose.msra.mxu0 0.0
    %130 = vmatprep.subr.mxu0 0.0
    %131 = vmatpush2.xpose.msra.mxu0 0.0
    %132 = vmatprep.subr.mxu0 0.0
    %133 = vmatpush2.xpose.msra.mxu0 0.0
    %134 = vmatprep.subr.mxu0 0.0
    %135 = vmatpush2.xpose.msra.mxu0 0.0
    %136 = vmatprep.subr.mxu0 0.0
    %137 = vmatpush2.xpose.msra.mxu0 0.0
    %138 = vmatprep.subr.mxu0 0.0
    %139 = vmatpush2.xpose.msra.mxu0 0.0
    %140 = vmatprep.subr.mxu0 0.0
    %141 = vmatpush2.xpose.msra.mxu0 0.0
    %142 = vmatprep.subr.mxu0 0.0
    %143 = vmatpush2.xpose.msra.mxu0 0.0
    %144 = vmatprep.subr.mxu0 0.0
    %145 = vmatpush2.xpose.msra.mxu0 0.0
    %146 = vmatprep.subr.mxu0 0.0
    %147 = vmatpush2.xpose.msra.mxu0 0.0
    %148 = vmatprep.subr.mxu0 0.0
    %149 = vmatpush2.xpose.msra.mxu0 0.0
    %150 = vmatprep.subr.mxu0 0.0
    %151 = vmatpush2.xpose.msra.mxu0 0.0
    %152 = vmatprep.subr.mxu0 0.0
    %153 = vmatpush2.xpose.msra.mxu0 0.0
    %154 = vmatprep.subr.mxu0 0.0
    %155 = vmatpush2.xpose.msra.mxu0 0.0
    %156 = vmatprep.subr.mxu0 0.0
    %157 = vmatpush2.xpose.msra.mxu0 0.0
    %158 = vmatprep.mubr.f32.mxu0 0.0
    %159 = vmatmul.mubr.f32.gmra.mxu0 %v89
    %v160 = vpop.f32.mrf.mxu0
    %v161 = vadd.f32 0.0, %v160
    %v162 = vpop.f32.mrf.mxu0
    %163 = vdwg.mxu0
    %v164 = vlaneseq
    %v165 = vshrl.u32 %v164, 7
    %s166 = smul.u32 0, 8
    %v167 = vstv %s166
    %v168 = vadd.s32 %v165, %v167
    %v169 = vlaneseq
    %v170 = vand.u32 %v169, 127
    %s171 = smul.u32 0, 8
    %v172 = vstv %s171
    %v173 = vadd.s32 %v170, %v172
    %vm174 = vcmp.eq.s32.totalorder %v168, %v173
    %v175 = vsel %vm174, -142.85715, %v161
    %v176 = vld [vmem:[#allocation3] sm:$0xff]
    %vm177 = vcmask 64512
    %v178 = vsel %vm177, %v175, -inf
    %179 = vmax.xlane.f32.xlu0 %v178
    %v180 = vpop.xlane.xlu0 %179
    %v181 = vmax.f32 %v176, %v180
    %v182 = vld [vmem:[#allocation4] sm:$0xff]
    %v183 = vsub.f32 %v176, %v181
    %v184 = vmul.f32 %v183, 1.442695
    %v185 = vpow.pop %v184
    %v186 = vmul.f32 %v182, %v185
    %188 = vset.pattern.permute.xlu0 0
    %189 = vperm.xlu0 %188, %v181
    %v190 = vpop.permute.xlu0 %189
    %v192 = vsub.f32 %v175, %v190
    %v193 = vmul.f32 %v192, 1.442695
    %v194 = vpow.pop %v193
    %v195 = vsel %vm177, %v194, 0.0
    %196 = vadd.xlane.f32.xlu0 %v195
    %v197 = vpop.xlane.xlu0 %196
    %v198 = vadd.f32 %v186, %v197
    %vm199 = vcmask 7168
    %200 = vst.msk [vmem:[#allocation4] sm:$0xff] %vm199, %v198
    %201 = vst.msk [vmem:[#allocation3] sm:$0xff] %vm199, %v181
    // Predicated region
    $region30: #{tpu_custom_call.1} parent=1 // pred_check
      %p202 = pneg %p59
    $region31: #{tpu_custom_call.1} parent=1 // pred_check_branch
      %204 = sbr.rel (%p202) target = $region33
    $region32: #{tpu_custom_call.1} parent=1 // pred_region
      %v205 = vld [vmem:[#allocation3] sm:$0xff]
      %v206 = vld [vmem:[#allocation4] sm:$0xff]
      %v207 = vlog2.pop %v206
      %v208 = vmul.f32 %v207, 0.6931472
      %v209 = vadd.f32 %v205, %v208
      %v210 = vld [vmem:[#allocation2] sm:$0xff]
      %v211 = vsub.f32 %v209, %v210
      %212 = vst.msk [vmem:[%s3] sm:$0xff] %vm199, %v211
    $region33: #{tpu_custom_call.1} parent=1 // pred_fallthru
      _
    // Predicated region
    $region34: #{tpu_custom_call.1} parent=1 // pred_check
      _
    $region35: #{tpu_custom_call.1} parent=1 // pred_check_branch
      %214 = sbr.rel (0) target = $region37
    $region36: #{tpu_custom_call.1} parent=1 // pred_region
      _
    $region37: #{tpu_custom_call.1} parent=1 // pred_fallthru
      _
    // Predicated region
    $region38: #{tpu_custom_call.1} parent=1 // pred_check
      _
    $region39: #{tpu_custom_call.1} parent=1 // pred_check_branch
      %216 = sbr.rel (0) target = $region41
    $region40: #{tpu_custom_call.1} parent=1 // pred_region
      _
    $region41: #{tpu_custom_call.1} parent=1 // pred_fallthru
      _
    %217 = vsyncpa [#allocation6], 1
    %218 = vsyncpa [#allocation8], 1

</llo_original>
